<compile_context>
chip_gen: v7x
topology: tpu7x:2x2x1
jax: 0.10.0
libtpu: 0.0.40
codegen_flags: <defaults>
</compile_context>

<pallas_src>
import functools

import jax
import jax.numpy as jnp
from jax.experimental import pallas as pl
from jax.experimental.pallas import tpu as pltpu


def _round_up(n, m):
    return (n + m - 1) // m * m


def _cdiv(a, b):
    return -(-a // b)


def _choose_tile(batch, tile_b):
    """Batch-tile size: <= tile_b, multiple of 16 (bf16 output sublane packing),
    and chosen so the grid length is 1 or an even number (v7x has 2 TCs)."""
    per_core = _cdiv(batch, 2)
    steps = max(1, _cdiv(per_core, tile_b))
    tb = _round_up(_cdiv(per_core, steps), 16)
    return max(16, min(tb, _round_up(tile_b, 16)))


def policy_mlp_kernel(x_ref, w_ref, b_ref, out_ref, *, S, Hp, Ap, num_actions):
    # x tile: (TILE_B, S) f32 -> bf16 once, for the MXU.
    x = x_ref[...].astype(jnp.bfloat16)

    # Per-layer views of the resident packed parameter slabs.  Each layer lives
    # in its own leading-index slab, so every slice starts at a tile-aligned
    # offset (no relayout copies per grid step).
    w1 = w_ref[0, 0:S, 0:Hp]        # (S,  Hp) bf16
    w2 = w_ref[1, 0:Hp, 0:Hp]       # (Hp, Hp) bf16
    w3 = w_ref[2, 0:Hp, 0:Ap]       # (Hp, Ap) bf16
    b1 = b_ref[0:1, 0:Hp]           # (1, Hp)  f32
    b2 = b_ref[1:2, 0:Hp]
    b3 = b_ref[2:3, 0:Ap]

    # affine1 (+ dropout1 = identity in eval) + ReLU, cast fused -> bf16 store.
    h1 = jnp.dot(x, w1, preferred_element_type=jnp.float32) + b1
    h1 = jnp.maximum(h1, 0.0).astype(jnp.bfloat16)

    # affine2 (+ dropout2 = identity in eval) + ReLU
    h2 = jnp.dot(h1, w2, preferred_element_type=jnp.float32) + b2
    h2 = jnp.maximum(h2, 0.0).astype(jnp.bfloat16)

    # affine3 (logits), lane-padded to Ap.
    logits = jnp.dot(h2, w3, preferred_element_type=jnp.float32) + b3

    # Softmax over the real action lanes only (mask the lane padding).
    col = jax.lax.broadcasted_iota(jnp.int32, logits.shape, 1)
    logits = jnp.where(col < num_actions, logits, -1e30)
    m = jnp.max(logits, axis=-1, keepdims=True)
    e = jnp.exp(logits - m)
    denom = jnp.sum(e, axis=-1, keepdims=True)
    out_ref[...] = (e * pl.reciprocal(denom, approx=True)).astype(out_ref.dtype)


def pack_params(params, state_space, hidden_dim, action_space):
    """Pack (w1,b1,w2,b2,w3,b3) into one (3,R,P) bf16 weight slab + (8,P) f32 biases."""
    w1, b1, w2, b2, w3, b3 = params
    Hp = _round_up(hidden_dim, 128)
    Ap = _round_up(action_space, 128)
    P = max(Hp, Ap)
    R = max(Hp, _round_up(state_space, 16))   # bf16 (16,128)-tile aligned rows

    w_packed = jnp.zeros((3, R, P), jnp.float32)
    w_packed = w_packed.at[0, :state_space, :hidden_dim].set(w1)
    w_packed = w_packed.at[1, :hidden_dim, :hidden_dim].set(w2)
    w_packed = w_packed.at[2, :hidden_dim, :action_space].set(w3)
    w_packed = w_packed.astype(jnp.bfloat16)

    b_packed = jnp.zeros((8, P), jnp.float32)
    b_packed = b_packed.at[0, :hidden_dim].set(b1.reshape(-1))
    b_packed = b_packed.at[1, :hidden_dim].set(b2.reshape(-1))
    b_packed = b_packed.at[2, :action_space].set(b3.reshape(-1))
    return w_packed, b_packed


def policy_network_forward(x, w_packed, b_packed, *, state_space, hidden_dim,
                           action_space, tile_b=2048):
    """x: (B, state_space) f32 -> (B, action_space) f32 action probabilities."""
    B = x.shape[0]
    S = state_space
    Hp = _round_up(hidden_dim, 128)
    Ap = _round_up(action_space, 128)

    tb = _choose_tile(B, tile_b)
    grid = (pl.cdiv(B, tb),)

    kernel = functools.partial(policy_mlp_kernel, S=S, Hp=Hp, Ap=Ap,
                               num_actions=action_space)

    # Lane-dense bf16 output slab: halves the dominant HBM writeback stream vs
    # f32 while keeping unmasked vst.  (Alternative for very large batches:
    # out_shape (B, action_space) with block (tb, action_space) — narrower
    # writeback but masked/strided stores; benchmark before switching.)
    out = pl.pallas_call(
        kernel,
        out_shape=jax.ShapeDtypeStruct((B, Ap), jnp.bfloat16),
        grid=grid,
        in_specs=[
            pl.BlockSpec((tb, S), lambda i: (i, 0)),                # batch-tiled x
            pl.BlockSpec(w_packed.shape, lambda i: (0, 0, 0)),      # resident weights
            pl.BlockSpec(b_packed.shape, lambda i: (0, 0)),         # resident biases
        ],
        out_specs=pl.BlockSpec((tb, Ap), lambda i: (i, 0)),
        compiler_params=pltpu.CompilerParams(
            dimension_semantics=("parallel",)),
    )(x.astype(jnp.float32), w_packed, b_packed)

    return out[:, :action_space].astype(jnp.float32)


def init_params(key, state_space, hidden_dim, action_space):
    """Deterministic init mimicking nn.Linear default (uniform +/- 1/sqrt(fan_in))."""
    def linear(k, fan_in, fan_out):
        kw, kb = jax.random.split(k)
        bound = 1.0 / jnp.sqrt(fan_in)
        w = jax.random.uniform(kw, (fan_in, fan_out), jnp.float32, -bound, bound)
        b = jax.random.uniform(kb, (fan_out,), jnp.float32, -bound, bound)
        return w, b

    k1, k2, k3 = jax.random.split(key, 3)
    w1, b1 = linear(k1, state_space, hidden_dim)
    w2, b2 = linear(k2, hidden_dim, hidden_dim)
    w3, b3 = linear(k3, hidden_dim, action_space)
    return (w1, b1, w2, b2, w3, b3)


def reference_forward(x, params):
    w1, b1, w2, b2, w3, b3 = params
    h1 = jnp.maximum(x @ w1 + b1, 0.0)
    h2 = jnp.maximum(h1 @ w2 + b2, 0.0)
    return jax.nn.softmax(h2 @ w3 + b3, axis=1)


if __name__ == "__main__":
    # Small shapes consistent with a CartPole-like env.
    B = 2             # batch
    STATE_SPACE = 4   # env.observation_space.shape[0]
    HIDDEN = 32       # hidden_dim
    ACTIONS = 2       # env.action_space.n

    key = jax.random.PRNGKey(0)
    k_params, k_x, k_xbig = jax.random.split(key, 3)
    params = init_params(k_params, STATE_SPACE, HIDDEN, ACTIONS)
    w_packed, b_packed = pack_params(params, STATE_SPACE, HIDDEN, ACTIONS)

    # --- small (single-step rollout) path ---
    x = jax.random.normal(k_x, (B, STATE_SPACE), jnp.float32)
    probs = policy_network_forward(x, w_packed, b_packed,
                                   state_space=STATE_SPACE, hidden_dim=HIDDEN,
                                   action_space=ACTIONS)
    probs = jax.block_until_ready(probs)
    assert probs.shape == (B, ACTIONS)
    # bf16 output + approx reciprocal: sums to 1 within ~1e-2, values within bf16/MXU tol.
    assert bool(jnp.all(jnp.abs(jnp.sum(probs, axis=1) - 1.0) < 1e-2))
    ref = reference_forward(x, params)
    assert bool(jnp.all(jnp.abs(probs - ref) < 3e-2))

    # --- batched path (the real perf target): ragged, megacore-parallel grid ---
    B_BIG = 1000
    x_big = jax.random.normal(k_xbig, (B_BIG, STATE_SPACE), jnp.float32)
    probs_big = policy_network_forward(x_big, w_packed, b_packed,
                                       state_space=STATE_SPACE, hidden_dim=HIDDEN,
                                       action_space=ACTIONS)
    probs_big = jax.block_until_ready(probs_big)
    assert probs_big.shape == (B_BIG, ACTIONS)
    assert bool(jnp.all(jnp.abs(jnp.sum(probs_big, axis=1) - 1.0) < 1e-2))
    ref_big = reference_forward(x_big, params)
    assert bool(jnp.all(jnp.abs(probs_big - ref_big) < 3e-2))

    print("KERNEL_OK")
</pallas_src>

<mosaic_0001>
module attributes {stable_mosaic.version = 11 : i64} {
  func.func @policy_mlp_kernel(%arg0: i32, %arg1: memref<16x4xf32, #tpu.memory_space<vmem>>, %arg2: memref<3x128x128xbf16, #tpu.memory_space<vmem>>, %arg3: memref<8x128xf32, #tpu.memory_space<vmem>>, %arg4: memref<16x128xbf16, #tpu.memory_space<vmem>>) attributes {dimension_semantics = [#tpu.dimension_semantics<parallel>], iteration_bounds = array<i64: 1>, scalar_prefetch = 0 : i64, scratch_operands = 0 : i64, tpu.core_type = #tpu.core_type<tc>, window_params = [{transform_indices = @transform_0, window_bounds = array<i64: 16, 4>}, {pipeline_mode = #tpu.pipeline_mode<synchronous>, transform_indices = @transform_1, window_bounds = array<i64: 3, 128, 128>}, {pipeline_mode = #tpu.pipeline_mode<synchronous>, transform_indices = @transform_2, window_bounds = array<i64: 8, 128>}, {transform_indices = @transform_3, window_bounds = array<i64: 16, 128>}]} {
    %c0 = arith.constant 0 : index
    %c0_0 = arith.constant 0 : index
    %0 = vector.load %arg1[%c0, %c0_0] : memref<16x4xf32, #tpu.memory_space<vmem>>, vector<16x4xf32>
    %1 = arith.truncf %0 : vector<16x4xf32> to vector<16x4xbf16>
    %c0_1 = arith.constant 0 : index
    %c0_2 = arith.constant 0 : index
    %c0_3 = arith.constant 0 : index
    %2 = vector.load %arg2[%c0_1, %c0_2, %c0_3] : memref<3x128x128xbf16, #tpu.memory_space<vmem>>, vector<1x4x128xbf16>
    %3 = vector.shape_cast %2 : vector<1x4x128xbf16> to vector<4x128xbf16>
    %c1 = arith.constant 1 : index
    %c0_4 = arith.constant 0 : index
    %c0_5 = arith.constant 0 : index
    %4 = vector.load %arg2[%c1, %c0_4, %c0_5] : memref<3x128x128xbf16, #tpu.memory_space<vmem>>, vector<1x128x128xbf16>
    %5 = vector.shape_cast %4 : vector<1x128x128xbf16> to vector<128x128xbf16>
    %c2 = arith.constant 2 : index
    %c0_6 = arith.constant 0 : index
    %c0_7 = arith.constant 0 : index
    %6 = vector.load %arg2[%c2, %c0_6, %c0_7] : memref<3x128x128xbf16, #tpu.memory_space<vmem>>, vector<1x128x128xbf16>
    %7 = vector.shape_cast %6 : vector<1x128x128xbf16> to vector<128x128xbf16>
    %c0_8 = arith.constant 0 : index
    %c0_9 = arith.constant 0 : index
    %8 = vector.load %arg3[%c0_8, %c0_9] : memref<8x128xf32, #tpu.memory_space<vmem>>, vector<1x128xf32>
    %c1_10 = arith.constant 1 : index
    %c0_11 = arith.constant 0 : index
    %9 = vector.load %arg3[%c1_10, %c0_11] : memref<8x128xf32, #tpu.memory_space<vmem>>, vector<1x128xf32>
    %c2_12 = arith.constant 2 : index
    %c0_13 = arith.constant 0 : index
    %10 = vector.load %arg3[%c2_12, %c0_13] : memref<8x128xf32, #tpu.memory_space<vmem>>, vector<1x128xf32>
    %cst = arith.constant dense<0.000000e+00> : vector<16x128xf32>
    %11 = tpu.matmul %1, %3, %cst {dimension_numbers = #tpu.dot_dimension_numbers<[1], [0], [0], [1], [0, 0, 1, 1], [], []>} : vector<16x4xbf16>, vector<4x128xbf16>, vector<16x128xf32> -> vector<16x128xf32>
    %12 = vector.broadcast %8 : vector<1x128xf32> to vector<16x128xf32>
    %13 = arith.addf %11, %12 : vector<16x128xf32>
    %cst_14 = arith.constant 0.000000e+00 : f32
    %14 = vector.broadcast %cst_14 : f32 to vector<16x128xf32>
    %15 = arith.maximumf %13, %14 : vector<16x128xf32>
    %16 = arith.truncf %15 : vector<16x128xf32> to vector<16x128xbf16>
    %cst_15 = arith.constant dense<0.000000e+00> : vector<16x128xf32>
    %17 = tpu.matmul %16, %5, %cst_15 {dimension_numbers = #tpu.dot_dimension_numbers<[1], [0], [0], [1], [0, 0, 1, 1], [], []>} : vector<16x128xbf16>, vector<128x128xbf16>, vector<16x128xf32> -> vector<16x128xf32>
    %18 = vector.broadcast %9 : vector<1x128xf32> to vector<16x128xf32>
    %19 = arith.addf %17, %18 : vector<16x128xf32>
    %cst_16 = arith.constant 0.000000e+00 : f32
    %20 = vector.broadcast %cst_16 : f32 to vector<16x128xf32>
    %21 = arith.maximumf %19, %20 : vector<16x128xf32>
    %22 = arith.truncf %21 : vector<16x128xf32> to vector<16x128xbf16>
    %cst_17 = arith.constant dense<0.000000e+00> : vector<16x128xf32>
    %23 = tpu.matmul %22, %7, %cst_17 {dimension_numbers = #tpu.dot_dimension_numbers<[1], [0], [0], [1], [0, 0, 1, 1], [], []>} : vector<16x128xbf16>, vector<128x128xbf16>, vector<16x128xf32> -> vector<16x128xf32>
    %24 = vector.broadcast %10 : vector<1x128xf32> to vector<16x128xf32>
    %25 = arith.addf %23, %24 : vector<16x128xf32>
    %26 = tpu.iota {dimensions = array<i32: 1>} : vector<16x128xi32>
    %c2_i32 = arith.constant 2 : i32
    %27 = vector.broadcast %c2_i32 : i32 to vector<16x128xi32>
    %28 = arith.cmpi slt, %26, %27 : vector<16x128xi32>
    %cst_18 = arith.constant -1.000000e+30 : f32
    %29 = vector.broadcast %cst_18 : f32 to vector<16x128xf32>
    %30 = arith.select %28, %25, %29 : vector<16x128xi1>, vector<16x128xf32>
    %cst_19 = arith.constant dense<0xFF800000> : vector<16xf32>
    %31 = vector.multi_reduction <maximumf>, %30, %cst_19 [1] : vector<16x128xf32> to vector<16xf32>
    %32 = vector.shape_cast %31 : vector<16xf32> to vector<16x1xf32>
    %33 = vector.broadcast %32 : vector<16x1xf32> to vector<16x128xf32>
    %34 = arith.subf %30, %33 : vector<16x128xf32>
    %35 = math.exp %34 : vector<16x128xf32>
    %cst_20 = arith.constant dense<0.000000e+00> : vector<16xf32>
    %36 = vector.multi_reduction <add>, %35, %cst_20 [1] : vector<16x128xf32> to vector<16xf32>
    %37 = vector.shape_cast %36 : vector<16xf32> to vector<16x1xf32>
    %38 = tpu.reciprocal %37 {approx = true} : vector<16x1xf32> -> vector<16x1xf32>
    %39 = vector.broadcast %38 : vector<16x1xf32> to vector<16x128xf32>
    %40 = arith.mulf %35, %39 : vector<16x128xf32>
    %41 = arith.truncf %40 : vector<16x128xf32> to vector<16x128xbf16>
    %c0_21 = arith.constant 0 : index
    %c0_22 = arith.constant 0 : index
    %42 = vector.load %arg4[%c0_21, %c0_22] : memref<16x128xbf16, #tpu.memory_space<vmem>>, vector<16x128xbf16>
    tpu.vector_store %arg4[%c0_21, %c0_22], %41 {strides = array<i32>} : memref<16x128xbf16, #tpu.memory_space<vmem>>, vector<16x128xbf16>,
    return
  }
  func.func @transform_0(%arg0: i32) -> (i32, i32) {
    %c0_i32 = arith.constant 0 : i32
    %c0_i32_0 = arith.constant 0 : i32
    return %arg0, %c0_i32 : i32, i32
  }
  func.func @transform_1(%arg0: i32) -> (i32, i32, i32) {
    %c0_i32 = arith.constant 0 : i32
    %c0_i32_0 = arith.constant 0 : i32
    %c0_i32_1 = arith.constant 0 : i32
    %c0_i32_2 = arith.constant 0 : i32
    return %c0_i32, %c0_i32_0, %c0_i32_1 : i32, i32, i32
  }
  func.func @transform_2(%arg0: i32) -> (i32, i32) {
    %c0_i32 = arith.constant 0 : i32
    %c0_i32_0 = arith.constant 0 : i32
    %c0_i32_1 = arith.constant 0 : i32
    return %c0_i32, %c0_i32_0 : i32, i32
  }
  func.func @transform_3(%arg0: i32) -> (i32, i32) {
    %c0_i32 = arith.constant 0 : i32
    %c0_i32_0 = arith.constant 0 : i32
    return %arg0, %c0_i32 : i32, i32
  }
}

</mosaic_0001>

<llo_original>
// kernel: tpu_custom_call.1
$region0: #{tpu_custom_call.1}
  #allocation0 [shape = 'u32[]', space=smem, size = 0x4, offset = 0x4, fixed_abs, tag = 'smem constant byte address 0x4 - core index']
  #allocation1 [shape = 'u32[144,128]{1,0:T(1,128)}', space=vmem, size = 0x12000, scoped, tag = 'internal scratch']
  %s0 = inlined_call_operand.hbm [shape: f32[2,4], index: 0, kind: input, shape index: {}]
  %s1 = inlined_call_operand.hbm [shape: bf16[3,128,128], index: 1, kind: input, shape index: {}]
  %s2 = inlined_call_operand.hbm [shape: f32[8,128], index: 2, kind: input, shape index: {}]
  %s3 = inlined_call_operand.hbm [shape: bf16[2,128], index: 3, kind: output, shape index: {}]
  %s4 = sld [smem:[#allocation0]]
  $region34: #{tpu_custom_call.1} parent=0
    _
  %s6 = ssub.s32 1, %s4
  %s7 = scalar_select 0, %s6, %s4
  $region1: #{tpu_custom_call.1} parent=0
    #allocation2 [shape = 'u8[8192]{0}', space=vmem, size = 0x2000, scoped, tag = 'input window, operand 0, single buffered']
    #allocation3 [shape = 's32[1]{0}', space=sflag, size = 0x4, scoped, tag = 'scoped memory for tpu_custom_call.1']
    #allocation4 [shape = 's32[1]{0}', space=sflag, size = 0x4, scoped, tag = 'scoped memory for tpu_custom_call.1']
    #allocation5 [shape = 'u8[98304]{0}', space=vmem, size = 0x18000, scoped, tag = 'input window, operand 1, single buffered']
    #allocation6 [shape = 's32[1]{0}', space=sflag, size = 0x4, scoped, tag = 'scoped memory for tpu_custom_call.1']
    #allocation7 [shape = 'u8[4096]{0}', space=vmem, size = 0x1000, scoped, tag = 'input window, operand 2, single buffered']
    #allocation8 [shape = 'u8[4096]{0}', space=vmem, size = 0x1000, scoped, tag = 'output window, operand 0, single buffered']
    %8 = vsyncpa [#allocation3], 0
    %9 = vsyncpa [#allocation6], 0
    %10 = vsyncpa [#allocation4], 0
    // Predicated region
    $region2: #{tpu_custom_call.1} parent=1 // pred_check
      _
    $region3: #{tpu_custom_call.1} parent=1 // pred_check_branch
      %12 = sbr.rel (0) target = $region5
    $region4: #{tpu_custom_call.1} parent=1 // pred_region
      %s14 = ssub.s32 256, 32
      %15 = vsyncadd [#allocation3], %s14
      %s16 = sshll.u32 [#allocation2], 4
      %s17 = int_to_ptr.vmem [resolvable:$true] %s16
      %22 = dma.hbm_to_vmem [thread:$0]  %s0, 32, %s17, [#allocation3], 32, 32, 2
    $region5: #{tpu_custom_call.1} parent=1 // pred_fallthru
      _
    // Predicated region
    $region6: #{tpu_custom_call.1} parent=1 // pred_check
      _
    $region7: #{tpu_custom_call.1} parent=1 // pred_check_branch
      %24 = sbr.rel (0) target = $region9
    $region8: #{tpu_custom_call.1} parent=1 // pred_region
      %s26 = ssub.s32 3072, 3072
      %27 = vsyncadd [#allocation6], %s26
      %s28 = sshll.u32 [#allocation5], 4
      %s29 = int_to_ptr.vmem [resolvable:$true] %s28
      %34 = dma.hbm_to_vmem [thread:$0]  %s1, 3072, %s29, [#allocation6], 64, 64, 4
    $region9: #{tpu_custom_call.1} parent=1 // pred_fallthru
      _
    // Predicated region
    $region10: #{tpu_custom_call.1} parent=1 // pred_check
      _
    $region11: #{tpu_custom_call.1} parent=1 // pred_check_branch
      %36 = sbr.rel (0) target = $region13
    $region12: #{tpu_custom_call.1} parent=1 // pred_region
      %s38 = ssub.s32 128, 128
      %39 = vsyncadd [#allocation6], %s38
      %s41 = sshll.u32 [#allocation7], 4
      %s42 = int_to_ptr.vmem [resolvable:$true] %s41
      %44 = dma.hbm_to_vmem [thread:$0]  %s2, 128, %s42, [#allocation6]
    $region13: #{tpu_custom_call.1} parent=1 // pred_fallthru
      _
    // Predicated region
    $region14: #{tpu_custom_call.1} parent=1 // pred_check
      _
    $region15: #{tpu_custom_call.1} parent=1 // pred_check_branch
      %46 = sbr.rel (0) target = $region17
    $region16: #{tpu_custom_call.1} parent=1 // pred_region
      %47 = dma.done [#allocation3], 256
    $region17: #{tpu_custom_call.1} parent=1 // pred_fallthru
      _
    // Predicated region
    $region18: #{tpu_custom_call.1} parent=1 // pred_check
      _
    $region19: #{tpu_custom_call.1} parent=1 // pred_check_branch
      %49 = sbr.rel (0) target = $region21
    $region20: #{tpu_custom_call.1} parent=1 // pred_region
      %50 = dma.done [#allocation6], 3072
    $region21: #{tpu_custom_call.1} parent=1 // pred_fallthru
      _
    // Predicated region
    $region22: #{tpu_custom_call.1} parent=1 // pred_check
      _
    $region23: #{tpu_custom_call.1} parent=1 // pred_check_branch
      %52 = sbr.rel (0) target = $region25
    $region24: #{tpu_custom_call.1} parent=1 // pred_region
      %53 = dma.done [#allocation6], 128
    $region25: #{tpu_custom_call.1} parent=1 // pred_fallthru
      _
    %v55 = vld [vmem:[#allocation2] sm:$0xff]
    %v56 = vld [vmem:[#allocation2 + $0x8] sm:$0xff]
    %v57 = vpack.c.bf16 %v56, %v55
    %v58 = vld [vmem:[#allocation5] sm:$0x3]
    %s59 = scalar_lea.vmem [#allocation5], 64
    %v60 = vld [vmem:[%s59] sm:$0xf]
    %v61 = vld [vmem:[%s59 + $0x4] sm:$0xf]
    %v62 = vld [vmem:[%s59 + $0x8] sm:$0xf]
    %v63 = vld [vmem:[%s59 + $0xc] sm:$0xf]
    %v64 = vld [vmem:[%s59 + $0x10] sm:$0xf]
    %v65 = vld [vmem:[%s59 + $0x14] sm:$0xf]
    %v66 = vld [vmem:[%s59 + $0x18] sm:$0xf]
    %v67 = vld [vmem:[%s59 + $0x1c] sm:$0xf]
    %v68 = vld [vmem:[%s59 + $0x20] sm:$0xf]
    %v69 = vld [vmem:[%s59 + $0x24] sm:$0xf]
    %v70 = vld [vmem:[%s59 + $0x28] sm:$0xf]
    %v71 = vld [vmem:[%s59 + $0x2c] sm:$0xf]
    %v72 = vld [vmem:[%s59 + $0x30] sm:$0xf]
    %v73 = vld [vmem:[%s59 + $0x34] sm:$0xf]
    %v74 = vld [vmem:[%s59 + $0x38] sm:$0xf]
    %v75 = vld [vmem:[%s59 + $0x3c] sm:$0xf]
    %s76 = scalar_lea.vmem [#allocation5], 128
    %v77 = vld [vmem:[%s76] sm:$0xf]
    %v78 = vld [vmem:[%s76 + $0x4] sm:$0xf]
    %v79 = vld [vmem:[%s76 + $0x8] sm:$0xf]
    %v80 = vld [vmem:[%s76 + $0xc] sm:$0xf]
    %v81 = vld [vmem:[%s76 + $0x10] sm:$0xf]
    %v82 = vld [vmem:[%s76 + $0x14] sm:$0xf]
    %v83 = vld [vmem:[%s76 + $0x18] sm:$0xf]
    %v84 = vld [vmem:[%s76 + $0x1c] sm:$0xf]
    %v85 = vld [vmem:[%s76 + $0x20] sm:$0xf]
    %v86 = vld [vmem:[%s76 + $0x24] sm:$0xf]
    %v87 = vld [vmem:[%s76 + $0x28] sm:$0xf]
    %v88 = vld [vmem:[%s76 + $0x2c] sm:$0xf]
    %v89 = vld [vmem:[%s76 + $0x30] sm:$0xf]
    %v90 = vld [vmem:[%s76 + $0x34] sm:$0xf]
    %v91 = vld [vmem:[%s76 + $0x38] sm:$0xf]
    %v92 = vld [vmem:[%s76 + $0x3c] sm:$0xf]
    %v93 = vld [vmem:[#allocation7] sm:$0x1]
    %v94 = vld [vmem:[#allocation7 + $0x1] sm:$0x1]
    %v95 = vld [vmem:[#allocation7 + $0x2] sm:$0x1]
    %v96 = vlaneseq
    %v97 = vshrl.u32 %v96, 7
    %v98 = vsub.s32 0, %v97
    %v99 = vrot.slane %v93, %v98
    %vm100 = vcmask 31744
    %v102 = vsel %vm100, %v57, 0
    %vm104 = vcmask 1041408
    %v106 = vsel %vm104, %v58, 0
    %108 = vmatprep.subr.bf16.mxu0 0
    %109 = vmatpush1.bf16.msra.mxu0 %v106
    %110 = vmatprep.subr.bf16.mxu0 0
    %111 = vmatpush1.bf16.msra.mxu0 0
    %112 = vmatprep.subr.bf16.mxu0 0
    %113 = vmatpush1.bf16.msra.mxu0 0
    %114 = vmatprep.subr.bf16.mxu0 0
    %115 = vmatpush1.bf16.msra.mxu0 0
    %116 = vmatprep.subr.bf16.mxu0 0
    %117 = vmatpush1.bf16.msra.mxu0 0
    %118 = vmatprep.subr.bf16.mxu0 0
    %119 = vmatpush1.bf16.msra.mxu0 0
    %120 = vmatprep.subr.bf16.mxu0 0
    %121 = vmatpush1.bf16.msra.mxu0 0
    %122 = vmatprep.subr.bf16.mxu0 0
    %123 = vmatpush1.bf16.msra.mxu0 0
    %124 = vmatprep.subr.bf16.mxu0 0
    %125 = vmatpush1.bf16.msra.mxu0 0
    %126 = vmatprep.subr.bf16.mxu0 0
    %127 = vmatpush1.bf16.msra.mxu0 0
    %128 = vmatprep.subr.bf16.mxu0 0
    %129 = vmatpush1.bf16.msra.mxu0 0
    %130 = vmatprep.subr.bf16.mxu0 0
    %131 = vmatpush1.bf16.msra.mxu0 0
    %132 = vmatprep.subr.bf16.mxu0 0
    %133 = vmatpush1.bf16.msra.mxu0 0
    %134 = vmatprep.subr.bf16.mxu0 0
    %135 = vmatpush1.bf16.msra.mxu0 0
    %136 = vmatprep.subr.bf16.mxu0 0
    %137 = vmatpush1.bf16.msra.mxu0 0
    %138 = vmatprep.subr.bf16.mxu0 0
    %139 = vmatpush1.bf16.msra.mxu0 0
    %140 = vmatprep.mubr.bf16.mxu0 0
    %141 = vmatmul.mubr.bf16.gmra.mrb[0].mxu0 %v102
    %v142 = vpop.f32.mrb[0].mxu0
    %v143 = vadd.f32 %v99, %v142
    %v144 = vpop.f32.mrb[0].mxu0
    %v145 = vpop.f32.mrb[0].mxu0
    %v146 = vadd.f32 %v99, %v145
    %v147 = vpop.f32.mrb[0].mxu0
    %148 = vdwg.mxu0
    %v149 = vmax.f32 %v143, 0.0
    %v150 = vmax.f32 %v146, 0.0
    %v151 = vpack.c.bf16 %v150, %v149
    %v152 = vlaneseq
    %v153 = vshrl.u32 %v152, 7
    %v154 = vsub.s32 0, %v153
    %v155 = vrot.slane %v94, %v154
    %v172 = vunpack.c.l.b16 %v60
    %v173 = vunpack.c.l.b16 %v61
    %v174 = vunpack.c.l.b16 %v62
    %v175 = vunpack.c.l.b16 %v63
    %v176 = vunpack.c.l.b16 %v64
    %v177 = vunpack.c.l.b16 %v65
    %v178 = vunpack.c.l.b16 %v66
    %v179 = vunpack.c.l.b16 %v67
    %v180 = vunpack.c.l.b16 %v68
    %v181 = vunpack.c.l.b16 %v69
    %v182 = vunpack.c.l.b16 %v70
    %v183 = vunpack.c.l.b16 %v71
    %v184 = vunpack.c.l.b16 %v72
    %v185 = vunpack.c.l.b16 %v73
    %v186 = vunpack.c.l.b16 %v74
    %v187 = vunpack.c.l.b16 %v75
    %v188 = vpack.c.b16 %v173, %v172
    %v189 = vpack.c.b16 %v175, %v174
    %v190 = vpack.c.b16 %v177, %v176
    %v191 = vpack.c.b16 %v179, %v178
    %v192 = vpack.c.b16 %v181, %v180
    %v193 = vpack.c.b16 %v183, %v182
    %v194 = vpack.c.b16 %v185, %v184
    %v195 = vpack.c.b16 %v187, %v186
    %204 = vmatprep.subr.bf16.mxu0 0
    %205 = vmatpush1.bf16.msra.mxu0 %v188
    %206 = vmatprep.subr.bf16.mxu0 0
    %207 = vmatpush1.bf16.msra.mxu0 %v189
    %208 = vmatprep.subr.bf16.mxu0 0
    %209 = vmatpush1.bf16.msra.mxu0 %v190
    %210 = vmatprep.subr.bf16.mxu0 0
    %211 = vmatpush1.bf16.msra.mxu0 %v191
    %212 = vmatprep.subr.bf16.mxu0 0
    %213 = vmatpush1.bf16.msra.mxu0 %v192
    %214 = vmatprep.subr.bf16.mxu0 0
    %215 = vmatpush1.bf16.msra.mxu0 %v193
    %216 = vmatprep.subr.bf16.mxu0 0
    %217 = vmatpush1.bf16.msra.mxu0 %v194
    %218 = vmatprep.subr.bf16.mxu0 0
    %219 = vmatpush1.bf16.msra.mxu0 %v195
    %220 = vmatprep.subr.bf16.mxu0 0
    %221 = vmatpush1.bf16.msra.mxu0 0
    %222 = vmatprep.subr.bf16.mxu0 0
    %223 = vmatpush1.bf16.msra.mxu0 0
    %224 = vmatprep.subr.bf16.mxu0 0
    %225 = vmatpush1.bf16.msra.mxu0 0
    %226 = vmatprep.subr.bf16.mxu0 0
    %227 = vmatpush1.bf16.msra.mxu0 0
    %228 = vmatprep.subr.bf16.mxu0 0
    %229 = vmatpush1.bf16.msra.mxu0 0
    %230 = vmatprep.subr.bf16.mxu0 0
    %231 = vmatpush1.bf16.msra.mxu0 0
    %232 = vmatprep.subr.bf16.mxu0 0
    %233 = vmatpush1.bf16.msra.mxu0 0
    %234 = vmatprep.subr.bf16.mxu0 0
    %235 = vmatpush1.bf16.msra.mxu0 0
    %236 = vmatprep.mubr.bf16.mxu0 0
    %237 = vmatmul.mubr.bf16.gmra.mrb[0].mxu0 %v151
    %v238 = vpop.f32.mrb[0].mxu0
    %v239 = vadd.f32 %v155, %v238
    %v240 = vpop.f32.mrb[0].mxu0
    %v241 = vpop.f32.mrb[0].mxu0
    %v242 = vadd.f32 %v155, %v241
    %v243 = vpop.f32.mrb[0].mxu0
    %244 = vdwg.mxu0
    %v245 = vmax.f32 %v239, 0.0
    %v246 = vmax.f32 %v242, 0.0
    %v247 = vpack.c.bf16 %v246, %v245
    %v248 = vlaneseq
    %v249 = vshrl.u32 %v248, 7
    %v250 = vsub.s32 0, %v249
    %v251 = vrot.slane %v95, %v250
    %v268 = vunpack.c.l.b16 %v77
    %v269 = vunpack.c.l.b16 %v78
    %v270 = vunpack.c.l.b16 %v79
    %v271 = vunpack.c.l.b16 %v80
    %v272 = vunpack.c.l.b16 %v81
    %v273 = vunpack.c.l.b16 %v82
    %v274 = vunpack.c.l.b16 %v83
    %v275 = vunpack.c.l.b16 %v84
    %v276 = vunpack.c.l.b16 %v85
    %v277 = vunpack.c.l.b16 %v86
    %v278 = vunpack.c.l.b16 %v87
    %v279 = vunpack.c.l.b16 %v88
    %v280 = vunpack.c.l.b16 %v89
    %v281 = vunpack.c.l.b16 %v90
    %v282 = vunpack.c.l.b16 %v91
    %v283 = vunpack.c.l.b16 %v92
    %v284 = vpack.c.b16 %v269, %v268
    %v285 = vpack.c.b16 %v271, %v270
    %v286 = vpack.c.b16 %v273, %v272
    %v287 = vpack.c.b16 %v275, %v274
    %v288 = vpack.c.b16 %v277, %v276
    %v289 = vpack.c.b16 %v279, %v278
    %v290 = vpack.c.b16 %v281, %v280
    %v291 = vpack.c.b16 %v283, %v282
    %300 = vmatprep.subr.bf16.mxu0 0
    %301 = vmatpush1.bf16.msra.mxu0 %v284
    %302 = vmatprep.subr.bf16.mxu0 0
    %303 = vmatpush1.bf16.msra.mxu0 %v285
    %304 = vmatprep.subr.bf16.mxu0 0
    %305 = vmatpush1.bf16.msra.mxu0 %v286
    %306 = vmatprep.subr.bf16.mxu0 0
    %307 = vmatpush1.bf16.msra.mxu0 %v287
    %308 = vmatprep.subr.bf16.mxu0 0
    %309 = vmatpush1.bf16.msra.mxu0 %v288
    %310 = vmatprep.subr.bf16.mxu0 0
    %311 = vmatpush1.bf16.msra.mxu0 %v289
    %312 = vmatprep.subr.bf16.mxu0 0
    %313 = vmatpush1.bf16.msra.mxu0 %v290
    %314 = vmatprep.subr.bf16.mxu0 0
    %315 = vmatpush1.bf16.msra.mxu0 %v291
    %316 = vmatprep.subr.bf16.mxu0 0
    %317 = vmatpush1.bf16.msra.mxu0 0
    %318 = vmatprep.subr.bf16.mxu0 0
    %319 = vmatpush1.bf16.msra.mxu0 0
    %320 = vmatprep.subr.bf16.mxu0 0
    %321 = vmatpush1.bf16.msra.mxu0 0
    %322 = vmatprep.subr.bf16.mxu0 0
    %323 = vmatpush1.bf16.msra.mxu0 0
    %324 = vmatprep.subr.bf16.mxu0 0
    %325 = vmatpush1.bf16.msra.mxu0 0
    %326 = vmatprep.subr.bf16.mxu0 0
    %327 = vmatpush1.bf16.msra.mxu0 0
    %328 = vmatprep.subr.bf16.mxu0 0
    %329 = vmatpush1.bf16.msra.mxu0 0
    %330 = vmatprep.subr.bf16.mxu0 0
    %331 = vmatpush1.bf16.msra.mxu0 0
    %332 = vmatprep.mubr.bf16.mxu0 0
    %333 = vmatmul.mubr.bf16.gmra.mrb[0].mxu0 %v247
    %v334 = vpop.f32.mrb[0].mxu0
    %v335 = vadd.f32 %v251, %v334
    %v336 = vpop.f32.mrb[0].mxu0
    %v337 = vpop.f32.mrb[0].mxu0
    %v338 = vadd.f32 %v251, %v337
    %v339 = vpop.f32.mrb[0].mxu0
    %340 = vdwg.mxu0
    %v341 = vlaneseq
    %v342 = vand.u32 %v341, 127
    %vm343 = vcmp.lt.s32.totalorder %v342, 2
    %v344 = vsel %vm343, %v335, -1e+30
    %v345 = vsel %vm343, %v338, -1e+30
    %346 = vmax.xlane.f32.xlu0 %v344
    %v347 = vpop.xlane.xlu0 %346
    %348 = vmax.xlane.f32.xlu0 %v345
    %v349 = vpop.xlane.xlu0 %348
    %v350 = vsub.f32 %v344, %v347
    %v351 = vsub.f32 %v345, %v349
    %v352 = vmul.f32 %v350, 1.442695
    %v353 = vpow.pop %v352
    %v354 = vmul.f32 %v351, 1.442695
    %v355 = vpow.pop %v354
    %356 = vadd.xlane.f32.xlu0 %v353
    %v357 = vpop.xlane.xlu0 %356
    %358 = vadd.xlane.f32.xlu0 %v355
    %v359 = vpop.xlane.xlu0 %358
    %v360 = vrcp.pop %v357
    %v361 = vrcp.pop %v359
    %v362 = vmul.f32 %v353, %v360
    %v363 = vmul.f32 %v355, %v361
    %v364 = vpack.c.bf16 %v363, %v362
    %v366 = vcombine.high %v364, %v364
    %v368 = vunpack.c.l.s4 1966171168
    %v369 = vunpack.c.0.s8 %v368
    %v370 = vlaneseq
    %v371 = vshrl.u32 %v370, 7
    %v372 = vsub.s32 %v369, %v371
    %v373 = vrot.slane %v364, %v372
    %v375 = vunpack.c.l.s4 1966171168
    %v376 = vunpack.c.0.s8 %v375
    %v377 = vlaneseq
    %v378 = vshrl.u32 %v377, 7
    %v379 = vsub.s32 %v376, %v378
    %v380 = vrot.slane %v366, %v379
    %v381 = vcombine.high %v373, %v373
    %v382 = vcombine.high %v380, %v380
    %v384 = vunpack.c.l.s4 1966171168
    %v385 = vunpack.c.0.s8 %v384
    %v386 = vlaneseq
    %v387 = vshrl.u32 %v386, 7
    %v388 = vsub.s32 %v385, %v387
    %v389 = vrot.slane %v373, %v388
    %v391 = vunpack.c.l.s4 1966171168
    %v392 = vunpack.c.0.s8 %v391
    %v393 = vlaneseq
    %v394 = vshrl.u32 %v393, 7
    %v395 = vsub.s32 %v392, %v394
    %v396 = vrot.slane %v380, %v395
    %v398 = vunpack.c.l.s4 1966171168
    %v399 = vunpack.c.0.s8 %v398
    %v400 = vlaneseq
    %v401 = vshrl.u32 %v400, 7
    %v402 = vsub.s32 %v399, %v401
    %v403 = vrot.slane %v381, %v402
    %v405 = vunpack.c.l.s4 1966171168
    %v406 = vunpack.c.0.s8 %v405
    %v407 = vlaneseq
    %v408 = vshrl.u32 %v407, 7
    %v409 = vsub.s32 %v406, %v408
    %v410 = vrot.slane %v382, %v409
    %v411 = vcombine.high %v389, %v389
    %v412 = vcombine.high %v396, %v396
    %v413 = vcombine.high %v403, %v403
    %v414 = vcombine.high %v410, %v410
    %423 = vst [vmem:[#allocation8] sm:$0x1] %v389
    %424 = vst [vmem:[#allocation8 + $0x1] sm:$0x1] %v403
    %425 = vst [vmem:[#allocation8 + $0x2] sm:$0x1] %v411
    %426 = vst [vmem:[#allocation8 + $0x3] sm:$0x1] %v413
    %427 = vst [vmem:[#allocation8 + $0x4] sm:$0x1] %v396
    %428 = vst [vmem:[#allocation8 + $0x5] sm:$0x1] %v410
    %429 = vst [vmem:[#allocation8 + $0x6] sm:$0x1] %v412
    %430 = vst [vmem:[#allocation8 + $0x7] sm:$0x1] %v414
    // Predicated region
    $region26: #{tpu_custom_call.1} parent=1 // pred_check
      _
    $region27: #{tpu_custom_call.1} parent=1 // pred_check_branch
      %432 = sbr.rel (0) target = $region29
    $region28: #{tpu_custom_call.1} parent=1 // pred_region
      %s434 = ssub.s32 128, 16
      %435 = vsyncadd [#allocation4], %s434
      %s436 = sshll.u32 [#allocation8], 4
      %s437 = int_to_ptr.vmem [resolvable:$true] %s436
      %442 = dma.vmem_to_hbm [thread:$0]  %s437, 16, %s3, [#allocation4], 16, 16, 1
    $region29: #{tpu_custom_call.1} parent=1 // pred_fallthru
      _
    // Predicated region
    $region30: #{tpu_custom_call.1} parent=1 // pred_check
      _
    $region31: #{tpu_custom_call.1} parent=1 // pred_check_branch
      %444 = sbr.rel (0) target = $region33
    $region32: #{tpu_custom_call.1} parent=1 // pred_region
      %445 = dma.done [#allocation4], 128
    $region33: #{tpu_custom_call.1} parent=1 // pred_fallthru
      _
    %446 = vsyncpa [#allocation3], 1
    %447 = vsyncpa [#allocation6], 1
    %448 = vsyncpa [#allocation4], 1

</llo_original>
